<compile_context>
chip_gen: v7x
topology: tpu7x:2x2x1
jax: 0.10.0
libtpu: 0.0.40
codegen_flags: <defaults>
</compile_context>

<pallas_src>
import jax
import jax.numpy as jnp
from jax import lax
from jax.experimental import pallas as pl
from jax.experimental.pallas import tpu as pltpu

EPS = 1e-5  # torch.nn.LayerNorm default


def _prenorm_kernel(x_ref, g_ref, b_ref, w_ref, wb_ref, o_ref, y_ref):
    """LayerNorm over the full last dim (row tile i), then y @ W[:, tn_j] + b."""
    # Recompute/refresh the normalized rows only when the N-tile index resets,
    # i.e. once per row tile.  y_ref persists across the inner ("arbitrary")
    # grid axis.
    @pl.when(pl.program_id(1) == 0)
    def _():
        x = x_ref[...].astype(jnp.float32)                # (tm, D)
        d = x.shape[-1]
        inv_d = 1.0 / d
        s1 = jnp.sum(x, axis=-1, keepdims=True)           # one pass: sum
        s2 = jnp.sum(x * x, axis=-1, keepdims=True)       # ... and sum of squares
        mean = s1 * inv_d
        var = s2 * inv_d - mean * mean
        inv = lax.rsqrt(var + EPS)
        y = (x - mean) * inv
        y = y * g_ref[...].astype(jnp.float32) + b_ref[...].astype(jnp.float32)
        # Store in the weight dtype so the MXU consumes native (e.g. bf16) operands.
        y_ref[...] = y.astype(y_ref.dtype)

    # fn: Linear(dim, dim) — MXU matmul, f32 accumulation via preferred dtype.
    out = jnp.dot(y_ref[...], w_ref[...], preferred_element_type=jnp.float32)
    out = out + wb_ref[...].astype(jnp.float32)
    o_ref[...] = out.astype(o_ref.dtype)


def prenorm(x, gamma, beta, w, w_bias, *, block_rows=256, block_cols=512):
    """x: (B, S, D) -> (B, S, D); LayerNorm(D) then Linear(D, D) (x @ W + b)."""
    B, S, D = x.shape
    R = B * S
    x2 = x.reshape(R, D)
    gamma2 = gamma.reshape(1, D)
    beta2 = beta.reshape(1, D)
    wb2 = w_bias.reshape(1, D)

    tm = min(block_rows, R)          # row tile (multiple of 8/128 for real shapes)
    tn = min(block_cols, D)          # output-column tile of W
    grid = (pl.cdiv(R, tm), pl.cdiv(D, tn))

    xi = jnp.dtype(x.dtype).itemsize
    wi = jnp.dtype(w.dtype).itemsize

    # VMEM budget: double-buffered x / W / out tiles + the y scratch + params.
    need = (2 * tm * D * xi          # x tile
            + 2 * D * tn * wi        # W tile
            + 2 * tm * tn * xi       # out tile
            + tm * D * wi            # normalized-row scratch
            + 4 * D * 4 + 2 * tn * 4)  # gamma / beta / bias (f32-ish, tiny)
    vmem_limit = int(min(max(2 * need, 32 * (1 << 20)), 64 * (1 << 20)))

    cost = pl.CostEstimate(
        flops=2 * R * D * D,
        transcendentals=0,
        bytes_accessed=R * D * xi + D * D * wi + 2 * D * 4 + D * wi + R * D * xi,
    )

    out2 = pl.pallas_call(
        _prenorm_kernel,
        out_shape=jax.ShapeDtypeStruct((R, D), x.dtype),
        grid_spec=pltpu.PrefetchScalarGridSpec(
            num_scalar_prefetch=0,
            grid=grid,
            in_specs=[
                pl.BlockSpec((tm, D), lambda i, j: (i, 0)),   # x rows (constant over j)
                pl.BlockSpec((1, D), lambda i, j: (0, 0)),    # gamma (full D)
                pl.BlockSpec((1, D), lambda i, j: (0, 0)),    # beta  (full D)
                pl.BlockSpec((D, tn), lambda i, j: (0, j)),   # W column tile
                pl.BlockSpec((1, tn), lambda i, j: (0, j)),   # Linear bias tile
            ],
            out_specs=pl.BlockSpec((tm, tn), lambda i, j: (i, j)),
            scratch_shapes=[pltpu.VMEM((tm, D), w.dtype)],    # cached normalized rows
        ),
        compiler_params=pltpu.CompilerParams(
            dimension_semantics=("parallel", "arbitrary"),
            vmem_limit_bytes=vmem_limit,
        ),
        cost_estimate=cost,
    )(x2, gamma2, beta2, w, wb2)

    return out2.reshape(B, S, D)


def prenorm_reference(x, gamma, beta, w, w_bias):
    xf = x.astype(jnp.float32)
    mean = jnp.mean(xf, axis=-1, keepdims=True)
    var = jnp.mean((xf - mean) ** 2, axis=-1, keepdims=True)
    y = (xf - mean) * lax.rsqrt(var + EPS)
    y = y * gamma.astype(jnp.float32) + beta.astype(jnp.float32)
    out = y @ w.astype(jnp.float32) + w_bias.astype(jnp.float32)
    return out.astype(x.dtype)


if __name__ == "__main__":
    B, S, D = 2, 16, 128
    key = jax.random.PRNGKey(0)
    kx, kg, kb, kw, kwb = jax.random.split(key, 5)

    x = jax.random.normal(kx, (B, S, D), dtype=jnp.float32)

    # Synthetic parameters (shapes implied by the module):
    #   norm = nn.LayerNorm(dim)  -> gamma, beta of shape (dim,)
    #   fn   = nn.Linear(dim,dim) -> W (dim, dim), bias (dim,)
    gamma = (1.0 + 0.01 * jax.random.normal(kg, (D,))).astype(jnp.float32)
    beta = (0.01 * jax.random.normal(kb, (D,))).astype(jnp.float32)
    w = (jax.random.normal(kw, (D, D)) / jnp.sqrt(D)).astype(jnp.float32)
    w_bias = (0.01 * jax.random.normal(kwb, (D,))).astype(jnp.float32)

    # f32 path: 2 row tiles x 1 column tile (exercises the row pipeline).
    out = prenorm(x, gamma, beta, w, w_bias, block_rows=16, block_cols=128)
    out = jax.block_until_ready(out)
    ref = prenorm_reference(x, gamma, beta, w, w_bias)
    assert out.shape == (B, S, D)
    assert jnp.allclose(out, ref, atol=1e-4, rtol=1e-4)

    # bf16 path: native-bf16 MXU operands, f32 accumulation.
    xb = x.astype(jnp.bfloat16)
    gb, bb = gamma.astype(jnp.bfloat16), beta.astype(jnp.bfloat16)
    wb, wbb = w.astype(jnp.bfloat16), w_bias.astype(jnp.bfloat16)
    out_bf16 = prenorm(xb, gb, bb, wb, wbb, block_rows=16, block_cols=128)
    out_bf16 = jax.block_until_ready(out_bf16)
    ref_bf16 = prenorm_reference(xb, gb, bb, wb, wbb)
    assert jnp.allclose(out_bf16.astype(jnp.float32),
                        ref_bf16.astype(jnp.float32), atol=0.1, rtol=0.05)

    print("KERNEL_OK")
</pallas_src>

<mosaic_0001>
module attributes {stable_mosaic.version = 11 : i64} {
  func.func @_prenorm_kernel(%arg0: i32, %arg1: i32, %arg2: memref<16x128xf32, #tpu.memory_space<vmem>>, %arg3: memref<1x128xf32, #tpu.memory_space<vmem>>, %arg4: memref<1x128xf32, #tpu.memory_space<vmem>>, %arg5: memref<128x128xf32, #tpu.memory_space<vmem>>, %arg6: memref<1x128xf32, #tpu.memory_space<vmem>>, %arg7: memref<16x128xf32, #tpu.memory_space<vmem>>, %arg8: memref<16x128xf32, #tpu.memory_space<vmem>>) attributes {dimension_semantics = [#tpu.dimension_semantics<parallel>, #tpu.dimension_semantics<arbitrary>], iteration_bounds = array<i64: 2, 1>, scalar_prefetch = 0 : i64, scratch_operands = 1 : i64, tpu.core_type = #tpu.core_type<tc>, window_params = [{transform_indices = @transform_0, window_bounds = array<i64: 16, 128>}, {pipeline_mode = #tpu.pipeline_mode<synchronous>, transform_indices = @transform_1, window_bounds = array<i64: 1, 128>}, {pipeline_mode = #tpu.pipeline_mode<synchronous>, transform_indices = @transform_2, window_bounds = array<i64: 1, 128>}, {transform_indices = @transform_3, window_bounds = array<i64: 128, 128>}, {transform_indices = @transform_4, window_bounds = array<i64: 1, 128>}, {transform_indices = @transform_5, window_bounds = array<i64: 16, 128>}]} {
    %c0_i32 = arith.constant 0 : i32
    %0 = arith.cmpi eq, %arg1, %c0_i32 : i32
    %1 = arith.extui %0 : i1 to i32
    %c0_i32_0 = arith.constant 0 : i32
    %2 = arith.cmpi ne, %1, %c0_i32_0 : i32
    scf.if %2 {
      %c0_8 = arith.constant 0 : index
      %c0_9 = arith.constant 0 : index
      %10 = vector.load %arg2[%c0_8, %c0_9] : memref<16x128xf32, #tpu.memory_space<vmem>>, vector<16x128xf32>
      %cst_10 = arith.constant dense<0.000000e+00> : vector<16xf32>
      %11 = vector.multi_reduction <add>, %10, %cst_10 [1] : vector<16x128xf32> to vector<16xf32>
      %12 = vector.shape_cast %11 : vector<16xf32> to vector<16x1xf32>
      %13 = arith.mulf %10, %10 : vector<16x128xf32>
      %cst_11 = arith.constant dense<0.000000e+00> : vector<16xf32>
      %14 = vector.multi_reduction <add>, %13, %cst_11 [1] : vector<16x128xf32> to vector<16xf32>
      %15 = vector.shape_cast %14 : vector<16xf32> to vector<16x1xf32>
      %cst_12 = arith.constant 7.812500e-03 : f32
      %16 = vector.broadcast %cst_12 : f32 to vector<16x1xf32>
      %17 = arith.mulf %12, %16 : vector<16x1xf32>
      %cst_13 = arith.constant 7.812500e-03 : f32
      %18 = vector.broadcast %cst_13 : f32 to vector<16x1xf32>
      %19 = arith.mulf %15, %18 : vector<16x1xf32>
      %20 = arith.mulf %17, %17 : vector<16x1xf32>
      %21 = arith.subf %19, %20 : vector<16x1xf32>
      %cst_14 = arith.constant 9.99999974E-6 : f32
      %22 = vector.broadcast %cst_14 : f32 to vector<16x1xf32>
      %23 = arith.addf %21, %22 : vector<16x1xf32>
      %24 = math.rsqrt %23 : vector<16x1xf32>
      %25 = vector.broadcast %17 : vector<16x1xf32> to vector<16x128xf32>
      %26 = arith.subf %10, %25 : vector<16x128xf32>
      %27 = vector.broadcast %24 : vector<16x1xf32> to vector<16x128xf32>
      %28 = arith.mulf %26, %27 : vector<16x128xf32>
      %c0_15 = arith.constant 0 : index
      %c0_16 = arith.constant 0 : index
      %29 = vector.load %arg3[%c0_15, %c0_16] : memref<1x128xf32, #tpu.memory_space<vmem>>, vector<1x128xf32>
      %30 = vector.broadcast %29 : vector<1x128xf32> to vector<16x128xf32>
      %31 = arith.mulf %28, %30 : vector<16x128xf32>
      %c0_17 = arith.constant 0 : index
      %c0_18 = arith.constant 0 : index
      %32 = vector.load %arg4[%c0_17, %c0_18] : memref<1x128xf32, #tpu.memory_space<vmem>>, vector<1x128xf32>
      %33 = vector.broadcast %32 : vector<1x128xf32> to vector<16x128xf32>
      %34 = arith.addf %31, %33 : vector<16x128xf32>
      %c0_19 = arith.constant 0 : index
      %c0_20 = arith.constant 0 : index
      %35 = vector.load %arg8[%c0_19, %c0_20] : memref<16x128xf32, #tpu.memory_space<vmem>>, vector<16x128xf32>
      tpu.vector_store %arg8[%c0_19, %c0_20], %34 {strides = array<i32>} : memref<16x128xf32, #tpu.memory_space<vmem>>, vector<16x128xf32>,
    } else {
    }
    %c0 = arith.constant 0 : index
    %c0_1 = arith.constant 0 : index
    %3 = vector.load %arg8[%c0, %c0_1] : memref<16x128xf32, #tpu.memory_space<vmem>>, vector<16x128xf32>
    %c0_2 = arith.constant 0 : index
    %c0_3 = arith.constant 0 : index
    %4 = vector.load %arg5[%c0_2, %c0_3] : memref<128x128xf32, #tpu.memory_space<vmem>>, vector<128x128xf32>
    %cst = arith.constant dense<0.000000e+00> : vector<16x128xf32>
    %5 = tpu.matmul %3, %4, %cst {dimension_numbers = #tpu.dot_dimension_numbers<[1], [0], [0], [1], [0, 0, 1, 1], [], []>} : vector<16x128xf32>, vector<128x128xf32>, vector<16x128xf32> -> vector<16x128xf32>
    %c0_4 = arith.constant 0 : index
    %c0_5 = arith.constant 0 : index
    %6 = vector.load %arg6[%c0_4, %c0_5] : memref<1x128xf32, #tpu.memory_space<vmem>>, vector<1x128xf32>
    %7 = vector.broadcast %6 : vector<1x128xf32> to vector<16x128xf32>
    %8 = arith.addf %5, %7 : vector<16x128xf32>
    %c0_6 = arith.constant 0 : index
    %c0_7 = arith.constant 0 : index
    %9 = vector.load %arg7[%c0_6, %c0_7] : memref<16x128xf32, #tpu.memory_space<vmem>>, vector<16x128xf32>
    tpu.vector_store %arg7[%c0_6, %c0_7], %8 {strides = array<i32>} : memref<16x128xf32, #tpu.memory_space<vmem>>, vector<16x128xf32>,
    return
  }
  func.func @transform_0(%arg0: i32, %arg1: i32) -> (i32, i32) {
    %c0_i32 = arith.constant 0 : i32
    %c0_i32_0 = arith.constant 0 : i32
    return %arg0, %c0_i32 : i32, i32
  }
  func.func @transform_1(%arg0: i32, %arg1: i32) -> (i32, i32) {
    %c0_i32 = arith.constant 0 : i32
    %c0_i32_0 = arith.constant 0 : i32
    %c0_i32_1 = arith.constant 0 : i32
    return %c0_i32, %c0_i32_0 : i32, i32
  }
  func.func @transform_2(%arg0: i32, %arg1: i32) -> (i32, i32) {
    %c0_i32 = arith.constant 0 : i32
    %c0_i32_0 = arith.constant 0 : i32
    %c0_i32_1 = arith.constant 0 : i32
    return %c0_i32, %c0_i32_0 : i32, i32
  }
  func.func @transform_3(%arg0: i32, %arg1: i32) -> (i32, i32) {
    %c0_i32 = arith.constant 0 : i32
    %c0_i32_0 = arith.constant 0 : i32
    return %c0_i32, %arg1 : i32, i32
  }
  func.func @transform_4(%arg0: i32, %arg1: i32) -> (i32, i32) {
    %c0_i32 = arith.constant 0 : i32
    %c0_i32_0 = arith.constant 0 : i32
    return %c0_i32, %arg1 : i32, i32
  }
  func.func @transform_5(%arg0: i32, %arg1: i32) -> (i32, i32) {
    %c0_i32 = arith.constant 0 : i32
    return %arg0, %arg1 : i32, i32
  }
}

</mosaic_0001>

<llo_original>
// kernel: tpu_custom_call.1
$region0: #{tpu_custom_call.1}
  #allocation0 [shape = 'u32[]', space=smem, size = 0x4, offset = 0x4, fixed_abs, tag = 'smem constant byte address 0x4 - core index']
  #allocation1 [shape = 'u32[144,128]{1,0:T(1,128)}', space=vmem, size = 0x12000, scoped, tag = 'internal scratch']
  #allocation2 [shape = 'f32[16,128]{1,0:T(8,128)}', space=vmem, size = 0x2000, scoped, tag = 'scratch operand']
  %s0 = inlined_call_operand.hbm [shape: f32[32,128], index: 0, kind: input, shape index: {}]
  %s1 = inlined_call_operand.vmem [shape: f32[1,128], index: 1, kind: input, shape index: {}]
  %s2 = inlined_call_operand.vmem [shape: f32[1,128], index: 2, kind: input, shape index: {}]
  %s3 = inlined_call_operand.hbm [shape: f32[128,128], index: 3, kind: input, shape index: {}]
  %s4 = inlined_call_operand.vmem [shape: f32[1,128], index: 4, kind: input, shape index: {}]
  %s5 = inlined_call_operand.hbm [shape: f32[32,128], index: 5, kind: output, shape index: {}]
  %s6 = sld [smem:[#allocation0]]
  $region65: #{tpu_custom_call.1} parent=0
    _
  %s8 = ssub.s32 1, %s6
  %s9 = scalar_select 0, %s8, %s6
  $region1: #{tpu_custom_call.1} parent=0
    #allocation3 [shape = 'u8[16384]{0}', space=vmem, size = 0x4000, scoped, tag = 'input window, operand 0']
    #allocation4 [shape = 's32[2]{0}', space=sflag, size = 0x8, scoped, tag = 'scoped memory for tpu_custom_call.1']
    #allocation5 [shape = 's32[2]{0}', space=sflag, size = 0x8, scoped, tag = 'scoped memory for tpu_custom_call.1']
    #allocation6 [shape = 'u8[65536]{0}', space=vmem, size = 0x10000, scoped, tag = 'input window, operand 3, single buffered']
    #allocation7 [shape = 's32[1]{0}', space=sflag, size = 0x4, scoped, tag = 'scoped memory for tpu_custom_call.1']
    #allocation8 [shape = 'u8[16384]{0}', space=vmem, size = 0x4000, scoped, tag = 'output window, operand 0']
    %10 = vsyncpa [#allocation4], 0
    %s11 = scalar_lea.sflag [#allocation4], 1
    %12 = vsyncpa %s11, 0
    %13 = vsyncpa [#allocation7], 0
    %14 = vsyncpa [#allocation5], 0
    %s15 = scalar_lea.sflag [#allocation5], 1
    %16 = vsyncpa %s15, 0
    loop: start=0, step=1, limit=4
    $region2: #{tpu_custom_call.1} parent=1 // loop_pre_header
      _
    $region3: #{tpu_custom_call.1} parent=1 // loop_header
      %s18 = sphi 0, %s22
      %p19 = scmp.ge.s32.totalorder %s18, 4
      %s25 = sphi 0, %s37
      %s26 = sphi 0, %s33
      %s27 = sphi 0, %s25
      %s28 = sphi 0, %s26
      %s29 = sphi 0, %s27
      %s30 = sphi 0, %s28
      %s40 = sphi 0, %s42
      %s43 = sphi 0, %s40
      %s44 = sphi 0, %s43
      %s60 = sphi 0, %s44
      %s64 = sphi 0, %s64
      %s66 = sphi 0, %s64
      %s67 = sphi 0, %s66
      %s81 = sphi 0, %s67
      %s85 = sphi 0, %s85
      %s87 = sphi 0, %s85
      %s88 = sphi 0, %s87
      %s102 = sphi 0, %s88
      %s108 = sphi 0, %s110
      %s111 = sphi 0, %s108
      %s112 = sphi 0, %s111
      %s128 = sphi 0, %s112
      %s134 = sphi 0, %s136
      %s137 = sphi 0, %s134
      %s138 = sphi 0, %s137
      %s154 = sphi 0, %s138
      %s162 = sphi 0, %s164
      %s165 = sphi 0, %s162
      %s166 = sphi 0, %s165
      %s182 = sphi 0, %s166
    $region4: #{tpu_custom_call.1} parent=1 // loop_header_branch
      %21 = sbr.rel (%p19) target = $region8
    $region5: #{tpu_custom_call.1} parent=1 // loop_body
      %s23 = ssub.s32 %s18, 1
      %s24 = ssub.s32 %s18, 2
      %s31 = sadd.s32 1, %s26
      %p32 = scmp.ge.s32.totalorder %s31, 1
      %s33 = scalar_select %p32, 0, %s31
      %s34 = sadd.s32 1, %s25
      %s35 = scalar_select %p32, %s34, %s25
      %p36 = scmp.ge.s32.totalorder %s35, 2
      %s37 = scalar_select %p36, 0, %s35
      %s38 = ssub.s32 %s25, %s37
      %p39 = scmp.eq.s32.totalorder %s38, 0
      %s41 = sadd.s32 %s40, 1
      %s42 = scalar_select %p39, %s40, %s41
      %p45 = pneg %p39
      %p46 = scmp.eq.s32.totalorder %s18, 1
      %p47 = por %p45, %p46
      %p48 = scmp.ne.s32.totalorder %s40, %s43
      %p49 = scmp.eq.s32.totalorder %s18, 0
      %p50 = por %p48, %p49
      %p51 = scmp.ne.s32.totalorder %s40, %s43
      %p52 = scmp.eq.s32.totalorder %s23, 1
      %p53 = por %p51, %p52
      %p54 = scmp.ne.s32.totalorder %s43, %s44
      %p55 = scmp.eq.s32.totalorder %s23, 0
      %p56 = por %p54, %p55
      %p57 = scmp.ne.s32.totalorder %s43, %s44
      %p58 = scmp.eq.s32.totalorder %s24, 1
      %p59 = por %p57, %p58
      %p61 = scmp.ne.s32.totalorder %s44, %s60
      %p62 = scmp.eq.s32.totalorder %s24, 0
      %p63 = por %p61, %p62
      %s65 = sadd.s32 %s64, 1
      %p68 = scmp.eq.s32.totalorder %s18, 1
      %p69 = scmp.ne.s32.totalorder %s64, %s66
      %p70 = scmp.eq.s32.totalorder %s18, 0
      %p71 = por %p69, %p70
      %p72 = scmp.ne.s32.totalorder %s64, %s66
      %p73 = scmp.eq.s32.totalorder %s23, 1
      %p74 = por %p72, %p73
      %p75 = scmp.ne.s32.totalorder %s66, %s67
      %p76 = scmp.eq.s32.totalorder %s23, 0
      %p77 = por %p75, %p76
      %p78 = scmp.ne.s32.totalorder %s66, %s67
      %p79 = scmp.eq.s32.totalorder %s24, 1
      %p80 = por %p78, %p79
      %p82 = scmp.ne.s32.totalorder %s67, %s81
      %p83 = scmp.eq.s32.totalorder %s24, 0
      %p84 = por %p82, %p83
      %s86 = sadd.s32 %s85, 1
      %p89 = scmp.eq.s32.totalorder %s18, 1
      %p90 = scmp.ne.s32.totalorder %s85, %s87
      %p91 = scmp.eq.s32.totalorder %s18, 0
      %p92 = por %p90, %p91
      %p93 = scmp.ne.s32.totalorder %s85, %s87
      %p94 = scmp.eq.s32.totalorder %s23, 1
      %p95 = por %p93, %p94
      %p96 = scmp.ne.s32.totalorder %s87, %s88
      %p97 = scmp.eq.s32.totalorder %s23, 0
      %p98 = por %p96, %p97
      %p99 = scmp.ne.s32.totalorder %s87, %s88
      %p100 = scmp.eq.s32.totalorder %s24, 1
      %p101 = por %p99, %p100
      %p103 = scmp.ne.s32.totalorder %s88, %s102
      %p104 = scmp.eq.s32.totalorder %s24, 0
      %p105 = por %p103, %p104
      %s106 = ssub.s32 %s26, %s33
      %p107 = scmp.eq.s32.totalorder %s106, 0
      %s109 = sadd.s32 %s108, 1
      %s110 = scalar_select %p107, %s108, %s109
      %p113 = pneg %p107
      %p114 = scmp.eq.s32.totalorder %s18, 1
      %p115 = por %p113, %p114
      %p116 = scmp.ne.s32.totalorder %s108, %s111
      %p117 = scmp.eq.s32.totalorder %s18, 0
      %p118 = por %p116, %p117
      %p119 = scmp.ne.s32.totalorder %s108, %s111
      %p120 = scmp.eq.s32.totalorder %s23, 1
      %p121 = por %p119, %p120
      %p122 = scmp.ne.s32.totalorder %s111, %s112
      %p123 = scmp.eq.s32.totalorder %s23, 0
      %p124 = por %p122, %p123
      %p125 = scmp.ne.s32.totalorder %s111, %s112
      %p126 = scmp.eq.s32.totalorder %s24, 1
      %p127 = por %p125, %p126
      %p129 = scmp.ne.s32.totalorder %s112, %s128
      %p130 = scmp.eq.s32.totalorder %s24, 0
      %p131 = por %p129, %p130
      %s132 = ssub.s32 %s26, %s33
      %p133 = scmp.eq.s32.totalorder %s132, 0
      %s135 = sadd.s32 %s134, 1
      %s136 = scalar_select %p133, %s134, %s135
      %p139 = pneg %p133
      %p140 = scmp.eq.s32.totalorder %s18, 1
      %p141 = por %p139, %p140
      %p142 = scmp.ne.s32.totalorder %s134, %s137
      %p143 = scmp.eq.s32.totalorder %s18, 0
      %p144 = por %p142, %p143
      %p145 = scmp.ne.s32.totalorder %s134, %s137
      %p146 = scmp.eq.s32.totalorder %s23, 1
      %p147 = por %p145, %p146
      %p148 = scmp.ne.s32.totalorder %s137, %s138
      %p149 = scmp.eq.s32.totalorder %s23, 0
      %p150 = por %p148, %p149
      %p151 = scmp.ne.s32.totalorder %s137, %s138
      %p152 = scmp.eq.s32.totalorder %s24, 1
      %p153 = por %p151, %p152
      %p155 = scmp.ne.s32.totalorder %s138, %s154
      %p156 = scmp.eq.s32.totalorder %s24, 0
      %p157 = por %p155, %p156
      %s158 = ssub.s32 %s25, %s37
      %s159 = ssub.s32 %s26, %s33
      %s160 = sor.u32 %s158, %s159
      %p161 = scmp.eq.s32.totalorder %s160, 0
      %s163 = sadd.s32 %s162, 1
      %s164 = scalar_select %p161, %s162, %s163
      %p167 = pneg %p161
      %p168 = scmp.eq.s32.totalorder %s18, 1
      %p169 = por %p167, %p168
      %p170 = scmp.ne.s32.totalorder %s162, %s165
      %p171 = scmp.eq.s32.totalorder %s18, 0
      %p172 = por %p170, %p171
      %p173 = scmp.ne.s32.totalorder %s162, %s165
      %p174 = scmp.eq.s32.totalorder %s23, 1
      %p175 = por %p173, %p174
      %p176 = scmp.ne.s32.totalorder %s165, %s166
      %p177 = scmp.eq.s32.totalorder %s23, 0
      %p178 = por %p176, %p177
      %p179 = scmp.ne.s32.totalorder %s165, %s166
      %p180 = scmp.eq.s32.totalorder %s24, 1
      %p181 = por %p179, %p180
      %p183 = scmp.ne.s32.totalorder %s166, %s182
      %p184 = scmp.eq.s32.totalorder %s24, 0
      %p185 = por %p183, %p184
      %p186 = scmp.le.s32.totalorder 1, %s18
      %p187 = scmp.lt.s32.totalorder %s18, 3
      %p188 = pnand %p186, %p187
      %p189 = pneg %p188
      // Predicated region
      $region9: #{tpu_custom_call.1} parent=5 // pred_check
        _
      $region10: #{tpu_custom_call.1} parent=5 // pred_check_branch
        %191 = sbr.rel (%p188) target = $region12
      $region11: #{tpu_custom_call.1} parent=5 // pred_region
        %s192 = ssub.s32 %s18, 1
        // Predicated region
        $region13: #{tpu_custom_call.1} parent=11 // pred_check
          %p193 = pneg %p77
        $region14: #{tpu_custom_call.1} parent=11 // pred_check_branch
          %195 = sbr.rel (%p193) target = $region16
        $region15: #{tpu_custom_call.1} parent=11 // pred_region
          _
        $region16: #{tpu_custom_call.1} parent=11 // pred_fallthru
          _
        // Predicated region
        $region17: #{tpu_custom_call.1} parent=11 // pred_check
          %p196 = pneg %p98
        $region18: #{tpu_custom_call.1} parent=11 // pred_check_branch
          %198 = sbr.rel (%p196) target = $region20
        $region19: #{tpu_custom_call.1} parent=11 // pred_region
          _
        $region20: #{tpu_custom_call.1} parent=11 // pred_fallthru
          _
        // Predicated region
        $region21: #{tpu_custom_call.1} parent=11 // pred_check
          %p199 = pneg %p124
        $region22: #{tpu_custom_call.1} parent=11 // pred_check_branch
          %201 = sbr.rel (%p199) target = $region24
        $region23: #{tpu_custom_call.1} parent=11 // pred_region
          %s203 = ssub.s32 2048, 2048
          %204 = vsyncadd [#allocation7], %s203
          %s205 = smul.addr %s28, 128
          %s206 = scalar_lea.hbm %s3, %s205
          %s207 = sshll.u32 [#allocation6], 4
          %s208 = int_to_ptr.vmem [resolvable:$true] %s207
          %213 = dma.hbm_to_vmem [thread:$0]  %s206, 2048, %s208, [#allocation7], 128, 128, 8
        $region24: #{tpu_custom_call.1} parent=11 // pred_fallthru
          _
        // Predicated region
        $region25: #{tpu_custom_call.1} parent=11 // pred_check
          %p214 = pneg %p150
        $region26: #{tpu_custom_call.1} parent=11 // pred_check_branch
          %216 = sbr.rel (%p214) target = $region28
        $region27: #{tpu_custom_call.1} parent=11 // pred_region
          %p217 = scmp.lt.s32.totalorder %s28, 0
          %s218 = scalar_select %p217, %s28, 0
          %s219 = scalar_lea.vmem %s4, %s218
        $region28: #{tpu_custom_call.1} parent=11 // pred_fallthru
          _
      $region12: #{tpu_custom_call.1} parent=5 // pred_fallthru
        _
      %p220 = scmp.lt.s32.totalorder %s18, 2
      // Predicated region
      $region29: #{tpu_custom_call.1} parent=5 // pred_check
        %p221 = pneg %p220
      $region30: #{tpu_custom_call.1} parent=5 // pred_check_branch
        %223 = sbr.rel (%p221) target = $region32
      $region31: #{tpu_custom_call.1} parent=5 // pred_region
        // Predicated region
        $region33: #{tpu_custom_call.1} parent=31 // pred_check
          %p224 = pneg %p50
        $region34: #{tpu_custom_call.1} parent=31 // pred_check_branch
          %226 = sbr.rel (%p224) target = $region36
        $region35: #{tpu_custom_call.1} parent=31 // pred_region
          %s227 = sand.u32 %s40, 1
          %s228 = scalar_lea.sflag [#allocation4], %s227
          %s229 = sand.u32 %s40, 1
          %s230 = smul.addr %s229, 16
          %s231 = scalar_lea.vmem [#allocation3], %s230
          %s232 = smul.u32 2, %s25
          %s234 = ssub.s32 256, 256
          %235 = vsyncadd %s228, %s234
          %s236 = smul.addr %s232, 128
          %s237 = scalar_lea.hbm %s0, %s236
          %s238 = sshll.u32 %s231, 4
          %s239 = int_to_ptr.vmem [resolvable:$true] %s238
          %244 = dma.hbm_to_vmem [thread:$0]  %s237, 256, %s239, %s228, 128, 128, 8
        $region36: #{tpu_custom_call.1} parent=31 // pred_fallthru
          _
      $region32: #{tpu_custom_call.1} parent=5 // pred_fallthru
        _
      %p245 = scmp.le.s32.totalorder 1, %s18
      %p246 = scmp.lt.s32.totalorder %s18, 3
      %p247 = pnand %p245, %p246
      %p248 = pneg %p247
      // Predicated region
      $region37: #{tpu_custom_call.1} parent=5 // pred_check
        _
      $region38: #{tpu_custom_call.1} parent=5 // pred_check_branch
        %250 = sbr.rel (%p247) target = $region40
      $region39: #{tpu_custom_call.1} parent=5 // pred_region
        %s251 = ssub.s32 %s18, 1
        %s252 = sand.u32 %s43, 1
        %s253 = scalar_lea.sflag [#allocation4], %s252
        %s254 = sand.u32 %s43, 1
        %s255 = smul.addr %s254, 16
        %s256 = scalar_lea.vmem [#allocation3], %s255
        // Predicated region
        $region41: #{tpu_custom_call.1} parent=39 // pred_check
          %p257 = pneg %p56
        $region42: #{tpu_custom_call.1} parent=39 // pred_check_branch
          %259 = sbr.rel (%p257) target = $region44
        $region43: #{tpu_custom_call.1} parent=39 // pred_region
          %260 = dma.done %s253, 256
        $region44: #{tpu_custom_call.1} parent=39 // pred_fallthru
          _
        // Predicated region
        $region45: #{tpu_custom_call.1} parent=39 // pred_check
          %p261 = pneg %p124
        $region46: #{tpu_custom_call.1} parent=39 // pred_check_branch
          %263 = sbr.rel (%p261) target = $region48
        $region47: #{tpu_custom_call.1} parent=39 // pred_region
          %264 = dma.done [#allocation7], 2048
        $region48: #{tpu_custom_call.1} parent=39 // pred_fallthru
          _
        %s265 = sand.u32 %s43, 1
        %s266 = scalar_lea.sflag [#allocation4], %s265
        %s267 = sand.u32 %s43, 1
        %s268 = smul.addr %s267, 16
        %s269 = scalar_lea.vmem [#allocation3], %s268
        %p270 = pneg %p56
        %p271 = pneg %p53
        %p272 = pneg %p77
        %p273 = pneg %p74
        %p274 = pneg %p98
        %p275 = pneg %p95
        %p276 = pneg %p124
        %p277 = pneg %p121
        %p278 = scmp.lt.s32.totalorder %s28, 0
        %s279 = scalar_select %p278, %s28, 0
        %s280 = scalar_lea.vmem %s4, %s279
        %p281 = pneg %p150
        %p282 = pneg %p147
        %p283 = pneg %p178
        %p284 = pneg %p175
        %s285 = sand.u32 %s165, 1
        %s286 = scalar_lea.sflag [#allocation5], %s285
        %s287 = sand.u32 %s165, 1
        %s288 = smul.addr %s287, 16
        %s289 = scalar_lea.vmem [#allocation8], %s288
        %s290 = smul.u32 2, %s27
        %p291 = scmp.lt.s32.totalorder %s28, 0
        %s292 = scalar_select %p291, %s28, 0
        %s293 = scalar_lea.vmem %s4, %s292
        %s294 = smul.u32 2, %s27
        %p295 = scmp.eq.s32.totalorder %s28, 0
        // Predicated region
        $region49: #{tpu_custom_call.1} parent=39 // pred_check
          %p296 = pneg %p295
        $region50: #{tpu_custom_call.1} parent=39 // pred_check_branch
          %298 = sbr.rel (%p296) target = $region52
        $region51: #{tpu_custom_call.1} parent=39 // pred_region
          %v299 = vld [vmem:[%s256] sm:$0xff]
          %v300 = vld [vmem:[%s256 + $0x8] sm:$0xff]
          %301 = vadd.xlane.f32.xlu0 %v299
          %v302 = vpop.xlane.xlu0 %301
          %303 = vadd.xlane.f32.xlu0 %v300
          %v304 = vpop.xlane.xlu0 %303
          %v305 = vmul.f32 %v299, %v299
          %v306 = vmul.f32 %v300, %v300
          %307 = vadd.xlane.f32.xlu0 %v305
          %v308 = vpop.xlane.xlu0 %307
          %309 = vadd.xlane.f32.xlu0 %v306
          %v310 = vpop.xlane.xlu0 %309
          %v311 = vmul.f32 %v302, 0.0078125
          %v312 = vmul.f32 %v304, 0.0078125
          %v313 = vmul.f32 %v308, 0.0078125
          %v314 = vmul.f32 %v310, 0.0078125
          %v315 = vmul.f32 %v311, %v311
          %v316 = vmul.f32 %v312, %v312
          %v317 = vsub.f32 %v313, %v315
          %v318 = vsub.f32 %v314, %v316
          %v319 = vadd.f32 %v317, 1e-05
          %v320 = vadd.f32 %v318, 1e-05
          %v321 = vrsqrt.pop %v319
          %v322 = vrsqrt.pop %v320
          %v323 = vsub.f32 %v299, %v311
          %v324 = vsub.f32 %v300, %v312
          %v325 = vmul.f32 %v323, %v321
          %v326 = vmul.f32 %v324, %v322
          %v327 = vld [vmem:[%s1] sm:$0x1]
          %v329 = vlaneseq
          %v330 = vshrl.u32 %v329, 7
          %v331 = vsub.s32 0, %v330
          %v332 = vrot.slane %v327, %v331
          %v334 = vmul.f32 %v325, %v332
          %v335 = vmul.f32 %v326, %v332
          %v336 = vld [vmem:[%s2] sm:$0x1]
          %v338 = vlaneseq
          %v339 = vshrl.u32 %v338, 7
          %v340 = vsub.s32 0, %v339
          %v341 = vrot.slane %v336, %v340
          %v343 = vadd.f32 %v334, %v341
          %v344 = vadd.f32 %v335, %v341
          %345 = vst [vmem:[#allocation2] sm:$0xff] %v343
          %346 = vst [vmem:[#allocation2 + $0x8] sm:$0xff] %v344
        $region52: #{tpu_custom_call.1} parent=39 // pred_fallthru
          _
        %v347 = vld [vmem:[#allocation2] sm:$0xff]
        %v348 = vld [vmem:[#allocation2 + $0x8] sm:$0xff]
        %v349 = vld [vmem:[#allocation6] sm:$0xff]
        %v350 = vld [vmem:[#allocation6 + $0x8] sm:$0xff]
        %v351 = vld [vmem:[#allocation6 + $0x10] sm:$0xff]
        %v352 = vld [vmem:[#allocation6 + $0x18] sm:$0xff]
        %v353 = vld [vmem:[#allocation6 + $0x20] sm:$0xff]
        %v354 = vld [vmem:[#allocation6 + $0x28] sm:$0xff]
        %v355 = vld [vmem:[#allocation6 + $0x30] sm:$0xff]
        %v356 = vld [vmem:[#allocation6 + $0x38] sm:$0xff]
        %v357 = vld [vmem:[#allocation6 + $0x40] sm:$0xff]
        %v358 = vld [vmem:[#allocation6 + $0x48] sm:$0xff]
        %v359 = vld [vmem:[#allocation6 + $0x50] sm:$0xff]
        %v360 = vld [vmem:[#allocation6 + $0x58] sm:$0xff]
        %v361 = vld [vmem:[#allocation6 + $0x60] sm:$0xff]
        %v362 = vld [vmem:[#allocation6 + $0x68] sm:$0xff]
        %v363 = vld [vmem:[#allocation6 + $0x70] sm:$0xff]
        %v364 = vld [vmem:[#allocation6 + $0x78] sm:$0xff]
        %v365 = vld [vmem:[%s293] sm:$0x1]
        %v367 = vlaneseq
        %v368 = vshrl.u32 %v367, 7
        %v369 = vsub.s32 0, %v368
        %v370 = vrot.slane %v365, %v369
        %372 = vmatprep.subr.mxu0 0.0
        %373 = vmatpush1.msra.mxu0 %v349
        %374 = vmatprep.subr.mxu0 0.0
        %375 = vmatpush1.msra.mxu0 %v350
        %376 = vmatprep.subr.mxu0 0.0
        %377 = vmatpush1.msra.mxu0 %v351
        %378 = vmatprep.subr.mxu0 0.0
        %379 = vmatpush1.msra.mxu0 %v352
        %380 = vmatprep.subr.mxu0 0.0
        %381 = vmatpush1.msra.mxu0 %v353
        %382 = vmatprep.subr.mxu0 0.0
        %383 = vmatpush1.msra.mxu0 %v354
        %384 = vmatprep.subr.mxu0 0.0
        %385 = vmatpush1.msra.mxu0 %v355
        %386 = vmatprep.subr.mxu0 0.0
        %387 = vmatpush1.msra.mxu0 %v356
        %388 = vmatprep.subr.mxu0 0.0
        %389 = vmatpush1.msra.mxu0 %v357
        %390 = vmatprep.subr.mxu0 0.0
        %391 = vmatpush1.msra.mxu0 %v358
        %392 = vmatprep.subr.mxu0 0.0
        %393 = vmatpush1.msra.mxu0 %v359
        %394 = vmatprep.subr.mxu0 0.0
        %395 = vmatpush1.msra.mxu0 %v360
        %396 = vmatprep.subr.mxu0 0.0
        %397 = vmatpush1.msra.mxu0 %v361
        %398 = vmatprep.subr.mxu0 0.0
        %399 = vmatpush1.msra.mxu0 %v362
        %400 = vmatprep.subr.mxu0 0.0
        %401 = vmatpush1.msra.mxu0 %v363
        %402 = vmatprep.subr.mxu0 0.0
        %403 = vmatpush1.msra.mxu0 %v364
        %404 = vmatprep.subr.mxu0 0.0
        %405 = vmatpush1.msra.mxu0 0.0
        %406 = vmatprep.subr.mxu0 0.0
        %407 = vmatpush1.msra.mxu0 0.0
        %408 = vmatprep.subr.mxu0 0.0
        %409 = vmatpush1.msra.mxu0 0.0
        %410 = vmatprep.subr.mxu0 0.0
        %411 = vmatpush1.msra.mxu0 0.0
        %412 = vmatprep.subr.mxu0 0.0
        %413 = vmatpush1.msra.mxu0 0.0
        %414 = vmatprep.subr.mxu0 0.0
        %415 = vmatpush1.msra.mxu0 0.0
        %416 = vmatprep.subr.mxu0 0.0
        %417 = vmatpush1.msra.mxu0 0.0
        %418 = vmatprep.subr.mxu0 0.0
        %419 = vmatpush1.msra.mxu0 0.0
        %420 = vmatprep.subr.mxu0 0.0
        %421 = vmatpush1.msra.mxu0 0.0
        %422 = vmatprep.subr.mxu0 0.0
        %423 = vmatpush1.msra.mxu0 0.0
        %424 = vmatprep.subr.mxu0 0.0
        %425 = vmatpush1.msra.mxu0 0.0
        %426 = vmatprep.subr.mxu0 0.0
        %427 = vmatpush1.msra.mxu0 0.0
        %428 = vmatprep.subr.mxu0 0.0
        %429 = vmatpush1.msra.mxu0 0.0
        %430 = vmatprep.subr.mxu0 0.0
        %431 = vmatpush1.msra.mxu0 0.0
        %432 = vmatprep.subr.mxu0 0.0
        %433 = vmatpush1.msra.mxu0 0.0
        %434 = vmatprep.subr.mxu0 0.0
        %435 = vmatpush1.msra.mxu0 0.0
        %436 = vmatprep.mubr.f32.mxu0 0.0
        %437 = vmatmul.mubr.f32.gmra.mrb[0].mxu0 %v347
        %v438 = vpop.f32.mrb[0].mxu0
        %v439 = vadd.f32 %v370, %v438
        %v440 = vpop.f32.mrb[0].mxu0
        %441 = vmatprep.mubr.f32.mxu0 0.0
        %442 = vmatmul.mubr.f32.gmra.mrb[0].mxu0 %v348
        %v443 = vpop.f32.mrb[0].mxu0
        %v444 = vadd.f32 %v370, %v443
        %v445 = vpop.f32.mrb[0].mxu0
        %446 = vdwg.mxu0
        %447 = vst [vmem:[%s289] sm:$0xff] %v439
        %448 = vst [vmem:[%s289 + $0x8] sm:$0xff] %v444
        %s449 = sand.u32 %s165, 1
        %s450 = scalar_lea.sflag [#allocation5], %s449
        %s451 = sand.u32 %s165, 1
        %s452 = smul.addr %s451, 16
        %s453 = scalar_lea.vmem [#allocation8], %s452
        // Predicated region
        $region53: #{tpu_custom_call.1} parent=39 // pred_check
          %p454 = pneg %p175
        $region54: #{tpu_custom_call.1} parent=39 // pred_check_branch
          %456 = sbr.rel (%p454) target = $region56
        $region55: #{tpu_custom_call.1} parent=39 // pred_region
          %s457 = smul.u32 2, %s27
          %s459 = ssub.s32 256, 256
          %460 = vsyncadd %s450, %s459
          %s461 = sadd.s32 %s28, %s457
          %s462 = smul.addr %s461, 128
          %s463 = scalar_lea.hbm %s5, %s462
          %s464 = sshll.u32 %s453, 4
          %s465 = int_to_ptr.vmem [resolvable:$true] %s464
          %470 = dma.vmem_to_hbm [thread:$0]  %s465, 256, %s463, %s450, 128, 128, 8
        $region56: #{tpu_custom_call.1} parent=39 // pred_fallthru
          _
      $region40: #{tpu_custom_call.1} parent=5 // pred_fallthru
        _
      %p471 = scmp.le.s32.totalorder 2, %s18
      // Predicated region
      $region57: #{tpu_custom_call.1} parent=5 // pred_check
        %p472 = pneg %p471
      $region58: #{tpu_custom_call.1} parent=5 // pred_check_branch
        %474 = sbr.rel (%p472) target = $region60
      $region59: #{tpu_custom_call.1} parent=5 // pred_region
        %s475 = ssub.s32 %s18, 2
        // Predicated region
        $region61: #{tpu_custom_call.1} parent=59 // pred_check
          %p476 = pneg %p181
        $region62: #{tpu_custom_call.1} parent=59 // pred_check_branch
          %478 = sbr.rel (%p476) target = $region64
        $region63: #{tpu_custom_call.1} parent=59 // pred_region
          %s479 = sand.u32 %s166, 1
          %s480 = scalar_lea.sflag [#allocation5], %s479
          %s481 = sand.u32 %s166, 1
          %s482 = smul.addr %s481, 16
          %s483 = scalar_lea.vmem [#allocation8], %s482
          %484 = dma.done %s480, 256
        $region64: #{tpu_custom_call.1} parent=59 // pred_fallthru
          _
      $region60: #{tpu_custom_call.1} parent=5 // pred_fallthru
        _
    $region6: #{tpu_custom_call.1} parent=1 // loop_footer
      %s22 = sadd.s32 1, %s18
    $region7: #{tpu_custom_call.1} parent=1 // loop_footer_branch
      %17 = sbr.rel target = $region3
    $region8: #{tpu_custom_call.1} parent=1 // loop_exit
      _
    %485 = vsyncpa [#allocation4], 1
    %s486 = scalar_lea.sflag [#allocation4], 1
    %487 = vsyncpa %s486, 1
    %488 = vsyncpa [#allocation7], 1
    %489 = vsyncpa [#allocation5], 1
    %s490 = scalar_lea.sflag [#allocation5], 1
    %491 = vsyncpa %s490, 1

</llo_original>
